<compile_context>
chip_gen: v6e
topology: v6e:2x2x1
jax: 0.10.0
libtpu: 0.0.40
codegen_flags: <defaults>
</compile_context>

<pallas_src>
import math
from functools import partial

import jax
import jax.numpy as jnp
import numpy as np
from jax.experimental import pallas as pl
from jax.experimental.pallas import tpu as pltpu

_LANE = 128
_SUBLANE = 8
_SMALL_BYTES = 4 * 1024 * 1024        # below this: single-step, full-array blocks
_TARGET_STEP_BYTES = 4 * 1024 * 1024  # tiled path: ~4 MiB moved per grid step
_VMEM_LIMIT = 40 * 1024 * 1024        # safe on every generation (v7x: 64 MiB VMEM)


def _copy_kernel(shape_ref, tex_ref, shape_out_ref, tex_out_ref):
    # LatentNet_nofc.forward is a parameter passthrough; the kernel is a copy.
    shape_out_ref[...] = shape_ref[...]
    tex_out_ref[...] = tex_ref[...]


def _fold_factor(width, n):
    """#instances folded per row so the folded lane width is a multiple of 128."""
    if width % _LANE == 0:
        return 1
    g = math.lcm(width, _LANE) // width
    if n % g == 0:
        return g
    # Fallback: keep native width (block dim == full array dim is legal);
    # stores become lane-masked -- correct, just slower.
    return 1


def _plan(n, w_shape, w_tex, itemsize):
    """Pick fold factors, instance-tile size and grid length (static shapes)."""
    g_s = _fold_factor(w_shape, n)
    g_t = _fold_factor(w_tex, n)
    total_bytes = n * (w_shape + w_tex) * itemsize

    gran = _SUBLANE * math.lcm(g_s, g_t)      # tm granularity (sublane x fold)
    if total_bytes <= _SMALL_BYTES or n <= gran:
        # Small config: one step, full-array blocks, single DMA per tensor.
        return g_s, g_t, n, 1

    bytes_per_instance = (w_shape + w_tex) * itemsize
    tm = max(gran, (_TARGET_STEP_BYTES // bytes_per_instance) // gran * gran)
    # Guarantee >= 2 grid steps so "parallel" semantics shard rows across the
    # two TensorCores of a v7x chip.
    max_tm = (n // 2) // gran * gran
    if max_tm >= gran:
        tm = min(tm, max_tm)
    tm = min(tm, n)
    return g_s, g_t, tm, pl.cdiv(n, tm)


def _forward_impl(shape_codes, texture_codes, *, alias):
    n, e, p = shape_codes.shape
    n2, t = texture_codes.shape
    assert n == n2
    w_shape = e * p
    itemsize = shape_codes.dtype.itemsize

    g_s, g_t, tm, grid_len = _plan(n, w_shape, t, itemsize)

    # Lane-dense slabs (free row-major reshapes, inverted after the call).
    shape_flat = shape_codes.reshape(n // g_s, w_shape * g_s)
    tex_flat = texture_codes.reshape(n // g_t, t * g_t)

    shape_block = (tm // g_s, w_shape * g_s)
    tex_block = (tm // g_t, t * g_t)

    shape_out, tex_out = pl.pallas_call(
        _copy_kernel,
        out_shape=(
            jax.ShapeDtypeStruct(shape_flat.shape, shape_flat.dtype),
            jax.ShapeDtypeStruct(tex_flat.shape, tex_flat.dtype),
        ),
        grid_spec=pltpu.PrefetchScalarGridSpec(
            num_scalar_prefetch=0,
            grid=(grid_len,),
            in_specs=[
                pl.BlockSpec(shape_block, lambda i: (i, 0)),
                pl.BlockSpec(tex_block, lambda i: (i, 0)),
            ],
            out_specs=[
                pl.BlockSpec(shape_block, lambda i: (i, 0)),
                pl.BlockSpec(tex_block, lambda i: (i, 0)),
            ],
        ),
        input_output_aliases={0: 0, 1: 1} if alias else {},
        compiler_params=pltpu.CompilerParams(
            dimension_semantics=("parallel",),
            vmem_limit_bytes=_VMEM_LIMIT,
        ),
    )(shape_flat, tex_flat)

    return shape_out.reshape(n, e, p), tex_out.reshape(n, t)


# Donated variant: outputs alias the parameter buffers (no new HBM allocation).
# Callers must rebind handles to the returned arrays (the class does this).
_forward_kernel_donated = jax.jit(partial(_forward_impl, alias=True),
                                  donate_argnums=(0, 1))
# Non-donating variant: plain fused copy, inputs stay valid.
_forward_kernel_copy = jax.jit(partial(_forward_impl, alias=False))


def latentnet_nofc_forward(shape_codes, texture_codes, *, use_kernel=True,
                           donate=False):
    """Pallas forward for LatentNet_nofc (pure parameter passthrough).

    use_kernel=False returns the arrays directly (zero HBM traffic -- the
    recommended deployment path).  use_kernel=True routes through the fused
    copy kernel; with donate=True the outputs alias the inputs (the input
    arrays are invalidated and must be rebound by the caller).
    """
    if shape_codes is None or texture_codes is None:
        # TODO(synk): init_method='train_avg' leaves the codes unset in the
        # PyTorch module (filled in externally); nothing to run until they are set.
        raise ValueError("shape/texture codes are uninitialized")
    if not use_kernel:
        return shape_codes, texture_codes
    fn = _forward_kernel_donated if donate else _forward_kernel_copy
    return fn(shape_codes, texture_codes)


class LatentNetNofcPallas:
    """JAX/Pallas re-implementation of LatentNet_nofc."""

    def __init__(self, num_expert, num_instance, dim, uni_head=False,
                 init_method='random', latent_map_type='same_dim', key=None):
        self.num_expert = num_expert
        self.num_codes = num_instance
        if latent_map_type == 'same_dim':
            self.obj_code_len = dim
            self.part_code_len = dim
        elif latent_map_type == 'half_dim':
            self.obj_code_len = dim
            self.part_code_len = dim // 2
        else:
            raise NotImplementedError(latent_map_type)
        self.uni_head = uni_head  # accepted but unused, as in the PyTorch spec

        if key is None:
            key = jax.random.PRNGKey(0)
        k_shape, k_tex = jax.random.split(key, 2)

        if init_method == 'random':
            # torch.randn(...) / sqrt(embdim / 2)
            self.shape_codes = (
                jax.random.normal(
                    k_shape, (num_instance, num_expert, self.part_code_len),
                    jnp.float32)
                / math.sqrt(self.part_code_len / 2.0))
            self.texture_codes = (
                jax.random.normal(
                    k_tex, (num_instance, self.obj_code_len), jnp.float32)
                / math.sqrt(self.obj_code_len / 2.0))
        elif init_method == 'zero':
            self.shape_codes = jnp.zeros(
                (num_instance, num_expert, self.part_code_len), jnp.float32)
            self.texture_codes = jnp.zeros(
                (num_instance, self.obj_code_len), jnp.float32)
        elif init_method == 'train_avg':
            # TODO(synk): 'train_avg' leaves the weights as None in PyTorch
            # (filled in externally); nothing to run until they are set.
            self.shape_codes = None
            self.texture_codes = None
        else:
            raise NotImplementedError(init_method)

    def forward(self, use_kernel=True, donate=False):
        out = latentnet_nofc_forward(self.shape_codes, self.texture_codes,
                                     use_kernel=use_kernel, donate=donate)
        if use_kernel and donate:
            # Outputs alias the (donated) parameter buffers; rebind so the
            # module parameters stay valid, mirroring PyTorch's by-reference
            # return of the nn.Parameter tensors.
            self.shape_codes, self.texture_codes = out
        return out


if __name__ == "__main__":
    # Small shapes consistent with the module:
    #   num_expert=4, num_instance=8, dim=32
    #   -> shape_codes (8, 4, 32), texture_codes (8, 32)
    num_expert, num_instance, dim = 4, 8, 32
    net = LatentNetNofcPallas(num_expert, num_instance, dim,
                              init_method='random',
                              latent_map_type='same_dim',
                              key=jax.random.PRNGKey(0))

    # Host snapshots of the parameters (the donated path invalidates the
    # original device buffers, so compare against these).
    expected_shape = jax.device_get(net.shape_codes)
    expected_tex = jax.device_get(net.texture_codes)

    # 1) Non-donating kernel path: plain fused, lane-dense copy.
    shape_out, tex_out = net.forward(use_kernel=True, donate=False)
    shape_out, tex_out = jax.block_until_ready((shape_out, tex_out))
    assert shape_out.shape == (num_instance, num_expert, dim)
    assert tex_out.shape == (num_instance, dim)
    assert np.array_equal(jax.device_get(shape_out), expected_shape)
    assert np.array_equal(jax.device_get(tex_out), expected_tex)

    # 2) Aliased/donated kernel path: outputs reuse the parameter buffers
    #    (module handles are rebound inside forward()).
    shape_out2, tex_out2 = net.forward(use_kernel=True, donate=True)
    shape_out2, tex_out2 = jax.block_until_ready((shape_out2, tex_out2))
    assert np.array_equal(jax.device_get(shape_out2), expected_shape)
    assert np.array_equal(jax.device_get(tex_out2), expected_tex)

    print("KERNEL_OK")
</pallas_src>

<mosaic_0001>
module attributes {stable_mosaic.version = 11 : i64} {
  func.func @_copy_kernel(%arg0: i32, %arg1: memref<8x128xf32, #tpu.memory_space<vmem>>, %arg2: memref<2x128xf32, #tpu.memory_space<vmem>>, %arg3: memref<8x128xf32, #tpu.memory_space<vmem>>, %arg4: memref<2x128xf32, #tpu.memory_space<vmem>>) attributes {dimension_semantics = [#tpu.dimension_semantics<parallel>], iteration_bounds = array<i64: 1>, scalar_prefetch = 0 : i64, scratch_operands = 0 : i64, tpu.core_type = #tpu.core_type<tc>, window_params = [{transform_indices = @transform_0, window_bounds = array<i64: 8, 128>}, {transform_indices = @transform_1, window_bounds = array<i64: 2, 128>}, {transform_indices = @transform_2, window_bounds = array<i64: 8, 128>}, {transform_indices = @transform_3, window_bounds = array<i64: 2, 128>}]} {
    %c0 = arith.constant 0 : index
    %c0_0 = arith.constant 0 : index
    %0 = vector.load %arg1[%c0, %c0_0] : memref<8x128xf32, #tpu.memory_space<vmem>>, vector<8x128xf32>
    %c0_1 = arith.constant 0 : index
    %c0_2 = arith.constant 0 : index
    %1 = vector.load %arg3[%c0_1, %c0_2] : memref<8x128xf32, #tpu.memory_space<vmem>>, vector<8x128xf32>
    tpu.vector_store %arg3[%c0_1, %c0_2], %0 {strides = array<i32>} : memref<8x128xf32, #tpu.memory_space<vmem>>, vector<8x128xf32>,
    %c0_3 = arith.constant 0 : index
    %c0_4 = arith.constant 0 : index
    %2 = vector.load %arg2[%c0_3, %c0_4] : memref<2x128xf32, #tpu.memory_space<vmem>>, vector<2x128xf32>
    %c0_5 = arith.constant 0 : index
    %c0_6 = arith.constant 0 : index
    %3 = vector.load %arg4[%c0_5, %c0_6] : memref<2x128xf32, #tpu.memory_space<vmem>>, vector<2x128xf32>
    tpu.vector_store %arg4[%c0_5, %c0_6], %2 {strides = array<i32>} : memref<2x128xf32, #tpu.memory_space<vmem>>, vector<2x128xf32>,
    return
  }
  func.func @transform_0(%arg0: i32) -> (i32, i32) {
    %c0_i32 = arith.constant 0 : i32
    %c0_i32_0 = arith.constant 0 : i32
    return %arg0, %c0_i32 : i32, i32
  }
  func.func @transform_1(%arg0: i32) -> (i32, i32) {
    %c0_i32 = arith.constant 0 : i32
    %c0_i32_0 = arith.constant 0 : i32
    return %arg0, %c0_i32 : i32, i32
  }
  func.func @transform_2(%arg0: i32) -> (i32, i32) {
    %c0_i32 = arith.constant 0 : i32
    %c0_i32_0 = arith.constant 0 : i32
    return %arg0, %c0_i32 : i32, i32
  }
  func.func @transform_3(%arg0: i32) -> (i32, i32) {
    %c0_i32 = arith.constant 0 : i32
    %c0_i32_0 = arith.constant 0 : i32
    return %arg0, %c0_i32 : i32, i32
  }
}

</mosaic_0001>

<llo_original>
// kernel: _forward_impl.1
$region0: #{_forward_impl.1}
  #allocation0 [shape = 'u32[]', space=smem, size = 0x4, offset = 0x4, fixed_abs, tag = 'smem constant byte address 0x4 - core index']
  #allocation1 [shape = 'u32[144,128]{1,0:T(1,128)}', space=vmem, size = 0x12000, scoped, tag = 'internal scratch']
  %s0 = inlined_call_operand.vmem [shape: f32[8,128], index: 0, kind: input, shape index: {}]
  %s1 = inlined_call_operand.vmem [shape: f32[2,128], index: 1, kind: input, shape index: {}]
  %s2 = inlined_call_operand.vmem [shape: f32[8,128], index: 2, kind: output, shape index: {0}]
  %s3 = inlined_call_operand.vmem [shape: f32[2,128], index: 3, kind: output, shape index: {1}]
  %4 = xla_tuple %s2, %s3
  %s5 = sld [smem:[#allocation0]]
  $region26: #{_forward_impl.1} parent=0
    _
  %s7 = ssub.s32 1, %s5
  %s8 = scalar_select 0, %s7, %s5
  // Predicated region
  $region2: #{_forward_impl.1} parent=0 // pred_check
    _
  $region3: #{_forward_impl.1} parent=0 // pred_check_branch
    %10 = sbr.rel (0) target = $region5
  $region4: #{_forward_impl.1} parent=0 // pred_region
    _
  $region5: #{_forward_impl.1} parent=0 // pred_fallthru
    _
  // Predicated region
  $region6: #{_forward_impl.1} parent=0 // pred_check
    _
  $region7: #{_forward_impl.1} parent=0 // pred_check_branch
    %12 = sbr.rel (0) target = $region9
  $region8: #{_forward_impl.1} parent=0 // pred_region
    _
  $region9: #{_forward_impl.1} parent=0 // pred_fallthru
    _
  %v13 = vld [vmem:[%s0] sm:$0xff]
  %14 = vst [vmem:[%s2] sm:$0xff] %v13
  %v15 = vld [vmem:[%s1] sm:$0x3]
  %16 = vst [vmem:[%s3] sm:$0x3] %v15
  // Predicated region
  $region10: #{_forward_impl.1} parent=0 // pred_check
    _
  $region11: #{_forward_impl.1} parent=0 // pred_check_branch
    %18 = sbr.rel (0) target = $region13
  $region12: #{_forward_impl.1} parent=0 // pred_region
    _
  $region13: #{_forward_impl.1} parent=0 // pred_fallthru
    _
  // Predicated region
  $region14: #{_forward_impl.1} parent=0 // pred_check
    _
  $region15: #{_forward_impl.1} parent=0 // pred_check_branch
    %20 = sbr.rel (0) target = $region17
  $region16: #{_forward_impl.1} parent=0 // pred_region
    _
  $region17: #{_forward_impl.1} parent=0 // pred_fallthru
    _
  // Predicated region
  $region18: #{_forward_impl.1} parent=0 // pred_check
    _
  $region19: #{_forward_impl.1} parent=0 // pred_check_branch
    %22 = sbr.rel (0) target = $region21
  $region20: #{_forward_impl.1} parent=0 // pred_region
    _
  $region21: #{_forward_impl.1} parent=0 // pred_fallthru
    _
  // Predicated region
  $region22: #{_forward_impl.1} parent=0 // pred_check
    _
  $region23: #{_forward_impl.1} parent=0 // pred_check_branch
    %24 = sbr.rel (0) target = $region25
  $region24: #{_forward_impl.1} parent=0 // pred_region
    _
  $region25: #{_forward_impl.1} parent=0 // pred_fallthru
    _

</llo_original>
